<compile_context>
chip_gen: v5e
topology: v5e:2x2
jax: 0.10.0
libtpu: 0.0.40
codegen_flags: <defaults>
</compile_context>

<pallas_src>
import math

import jax
import jax.numpy as jnp
from jax import lax
from jax.experimental import pallas as pl
from jax.experimental.pallas import tpu as pltpu


def _gelu_tanh(x):
    # Matches the PyTorch `gelu` in the module (tanh approximation).
    c = math.sqrt(2.0 / math.pi)
    return 0.5 * x * (1.0 + jnp.tanh(c * (x + 0.044715 * (x * x * x))))


def _round_up(x, m):
    return (x + m - 1) // m * m


def _const_block_spec(shape):
    """Constant (grid-invariant) block; single-buffer it if the API allows."""
    index_map = lambda i: (0,) * len(shape)
    try:
        return pl.BlockSpec(shape, index_map, pipeline_mode=pl.Buffered(1))
    except (TypeError, AttributeError):
        return pl.BlockSpec(shape, index_map)


def _emb_linear_gelu_kernel(idx_ref, emb_ref, w_ref, b_ref, out_ref):
    """One grid step = one tile of `tm` rows.

    idx_ref : VMEM (tm, 1) int32                 -- flat concept indices
    emb_ref : VMEM (concept_num_p, in_dim_p) bf16 -- zero-padded table (resident)
    w_ref   : VMEM (in_dim_p, out_dim_p) bf16     -- pre-scaled, pre-transposed W
    b_ref   : VMEM (1, out_dim_p) f32             -- zero-padded bias
    out_ref : VMEM (tm, out_dim_p)                -- output tile
    """
    tm = idx_ref.shape[0]
    cn_p = emb_ref.shape[0]

    # One-hot MXU gather: (tm, cn_p) @ (cn_p, in_dim_p).
    idx = idx_ref[...]                                         # (tm, 1) int32
    iota = lax.broadcasted_iota(jnp.int32, (tm, cn_p), 1)
    onehot = (idx == iota).astype(emb_ref.dtype)               # (tm, cn_p) bf16
    x = jnp.dot(onehot, emb_ref[...], preferred_element_type=jnp.float32)
    # Rows of x are exact copies of bf16 table rows (or zeros) -> exact recast.
    x = x.astype(w_ref.dtype)

    # (tm, in_dim_p) @ (in_dim_p, out_dim_p) on the MXU, f32 accumulation.
    y = jnp.dot(x, w_ref[...], preferred_element_type=jnp.float32)
    y = y + b_ref[...]
    out_ref[...] = _gelu_tanh(y).astype(out_ref.dtype)


def prepare_customized_embedding_params(emb_table, weight, bias, scale=1.0,
                                        param_dtype=jnp.bfloat16):
    """One-time parameter prep (do this at load/init, NOT every forward):
       transpose, fold `scale` into W, zero-pad to lane-dense shapes, cast bf16.
    """
    concept_num, in_dim = emb_table.shape
    out_dim = weight.shape[0]
    cn_p = _round_up(concept_num, 128)
    in_p = _round_up(in_dim, 128)
    out_p = _round_up(out_dim, 128)

    emb_p = jnp.pad(emb_table.astype(jnp.float32),
                    ((0, cn_p - concept_num), (0, in_p - in_dim))).astype(param_dtype)
    # Fold `scale` into W^T (exact: scale commutes with the matmul).
    w_t = jnp.pad(jnp.transpose(weight).astype(jnp.float32) * scale,
                  ((0, in_p - in_dim), (0, out_p - out_dim))).astype(param_dtype)
    b2d = jnp.pad(bias.astype(jnp.float32), (0, out_p - out_dim)).reshape(1, out_p)

    return {"emb": emb_p, "w": w_t, "b": b2d,
            "out_dim": out_dim, "concept_num": concept_num}


def customized_embedding_forward(index, params, tm=256, out_dtype=jnp.float32):
    """index: (bz, a) int32; params from prepare_customized_embedding_params.
       returns (bz, a, concept_out_dim) out_dtype.
    """
    bz, a = index.shape
    emb_p, w_t, b2d = params["emb"], params["w"], params["b"]
    out_dim = params["out_dim"]
    cn_p, in_p = emb_p.shape
    out_p = w_t.shape[1]

    n_rows = bz * a
    # Row tile: multiple of 8 sublanes; default 256 fills the v6e/v7x MXU M dim
    # (don't pad tiny problems all the way up).
    tm = min(tm, _round_up(n_rows, 8))
    n_rows_p = _round_up(n_rows, tm)

    idx2d = jnp.pad(index.reshape(-1).astype(jnp.int32),
                    (0, n_rows_p - n_rows)).reshape(n_rows_p, 1)

    grid = (n_rows_p // tm,)

    grid_spec = pltpu.PrefetchScalarGridSpec(
        num_scalar_prefetch=0,
        grid=grid,
        in_specs=[
            pl.BlockSpec((tm, 1), lambda i: (i, 0)),     # indices for this tile
            _const_block_spec((cn_p, in_p)),             # resident table (bf16)
            _const_block_spec((in_p, out_p)),            # resident weight (bf16)
            _const_block_spec((1, out_p)),               # resident bias (f32)
        ],
        out_specs=pl.BlockSpec((tm, out_p), lambda i: (i, 0)),
        scratch_shapes=[],
    )

    # Right-size the VMEM limit from actual buffer footprints (+50% headroom).
    pbytes = emb_p.dtype.itemsize
    vmem_needed = (
        2 * tm * 1 * 4                 # idx blocks (double-buffered)
        + 2 * cn_p * in_p * pbytes     # table (worst case: 2 buffers)
        + 2 * in_p * out_p * pbytes    # weight
        + 2 * 8 * out_p * 4            # bias (sublane-padded)
        + 2 * tm * out_p * 4           # output tiles
        + tm * cn_p * 4                # one-hot temporary
        + tm * in_p * 4                # gathered-x temporary
    )
    vmem_limit = min(128 * 1024 * 1024,
                     max(8 * 1024 * 1024, int(vmem_needed * 1.5)))

    cost = pl.CostEstimate(
        # gather matmul + linear matmul
        flops=2 * n_rows_p * cn_p * in_p + 2 * n_rows_p * in_p * out_p,
        transcendentals=n_rows_p * out_p,   # tanh in GELU
        # Real HBM traffic: table/weight/bias read once, indices once, out once.
        bytes_accessed=(cn_p * in_p * pbytes + in_p * out_p * pbytes
                        + out_p * 4 + n_rows_p * 4
                        + n_rows_p * out_p * jnp.dtype(out_dtype).itemsize),
    )

    out_flat = pl.pallas_call(
        _emb_linear_gelu_kernel,
        out_shape=jax.ShapeDtypeStruct((n_rows_p, out_p), out_dtype),
        grid_spec=grid_spec,
        compiler_params=pltpu.CompilerParams(
            # Row tiles are independent -> megacore-parallel on v7x.
            dimension_semantics=("parallel",),
            vmem_limit_bytes=vmem_limit,
        ),
        cost_estimate=cost,
    )(idx2d, emb_p, w_t, b2d)

    return out_flat[:n_rows, :out_dim].reshape(bz, a, out_dim)


def _reference_forward(index, emb_table, weight, bias, scale=1.0):
    x = jnp.take(emb_table, index, axis=0) * scale             # (bz, a, in_dim)
    y = jnp.einsum("bad,od->bao", x, weight) + bias            # (bz, a, out_dim)
    return _gelu_tanh(y)


if __name__ == "__main__":
    # Small shapes consistent with the module: index (bz, a); embedding table
    # (concept_num, concept_in_dim); linear (concept_in_dim -> concept_out_dim).
    bz, a = 2, 8
    concept_num, concept_in_dim, concept_out_dim = 50, 32, 64
    scale = 2.0
    init_range = 0.02

    key = jax.random.PRNGKey(0)
    k_emb, k_w, k_b, k_idx = jax.random.split(key, 4)

    # Deterministic parameter init (mirrors __init__):
    #   emb.weight ~ N(0, init_range); Linear default: U(-1/sqrt(in), 1/sqrt(in)).
    emb_table = init_range * jax.random.normal(
        k_emb, (concept_num, concept_in_dim), dtype=jnp.float32)
    bound = 1.0 / math.sqrt(concept_in_dim)
    weight = jax.random.uniform(
        k_w, (concept_out_dim, concept_in_dim), jnp.float32, -bound, bound)
    bias = jax.random.uniform(
        k_b, (concept_out_dim,), jnp.float32, -bound, bound)

    index = jax.random.randint(k_idx, (bz, a), 0, concept_num, dtype=jnp.int32)

    # Hoisted one-time parameter preparation (transpose / scale / pad / bf16).
    params = prepare_customized_embedding_params(emb_table, weight, bias, scale)

    out = customized_embedding_forward(index, params)
    out = jax.block_until_ready(out)

    ref = _reference_forward(index, emb_table, weight, bias, scale)
    assert out.shape == (bz, a, concept_out_dim)
    # bf16 table/weight operands (f32 accumulation) -> relaxed tolerance.
    assert jnp.allclose(out, ref, rtol=1e-2, atol=1e-2), "mismatch vs. reference"

    print("KERNEL_OK")
</pallas_src>

<mosaic_0001>
module attributes {stable_mosaic.version = 11 : i64} {
  func.func @_emb_linear_gelu_kernel(%arg0: i32, %arg1: memref<16x1xi32, #tpu.memory_space<vmem>>, %arg2: memref<128x128xbf16, #tpu.memory_space<vmem>>, %arg3: memref<128x128xbf16, #tpu.memory_space<vmem>>, %arg4: memref<1x128xf32, #tpu.memory_space<vmem>>, %arg5: memref<16x128xf32, #tpu.memory_space<vmem>>) attributes {dimension_semantics = [#tpu.dimension_semantics<parallel>], iteration_bounds = array<i64: 1>, scalar_prefetch = 0 : i64, scratch_operands = 0 : i64, tpu.core_type = #tpu.core_type<tc>, window_params = [{transform_indices = @transform_0, window_bounds = array<i64: 16, 1>}, {pipeline_mode = #tpu.pipeline_mode<synchronous>, transform_indices = @transform_1, window_bounds = array<i64: 128, 128>}, {pipeline_mode = #tpu.pipeline_mode<synchronous>, transform_indices = @transform_2, window_bounds = array<i64: 128, 128>}, {pipeline_mode = #tpu.pipeline_mode<synchronous>, transform_indices = @transform_3, window_bounds = array<i64: 1, 128>}, {transform_indices = @transform_4, window_bounds = array<i64: 16, 128>}]} {
    %c0 = arith.constant 0 : index
    %c0_0 = arith.constant 0 : index
    %0 = vector.load %arg1[%c0, %c0_0] : memref<16x1xi32, #tpu.memory_space<vmem>>, vector<16x1xi32>
    %1 = tpu.iota {dimensions = array<i32: 1>} : vector<16x128xi32>
    %2 = vector.broadcast %0 : vector<16x1xi32> to vector<16x128xi32>
    %3 = arith.cmpi eq, %2, %1 : vector<16x128xi32>
    %4 = arith.extui %3 : vector<16x128xi1> to vector<16x128xi32>
    %5 = arith.sitofp %4 : vector<16x128xi32> to vector<16x128xf32>
    %6 = arith.truncf %5 : vector<16x128xf32> to vector<16x128xbf16>
    %c0_1 = arith.constant 0 : index
    %c0_2 = arith.constant 0 : index
    %7 = vector.load %arg2[%c0_1, %c0_2] : memref<128x128xbf16, #tpu.memory_space<vmem>>, vector<128x128xbf16>
    %cst = arith.constant dense<0.000000e+00> : vector<16x128xf32>
    %8 = tpu.matmul %6, %7, %cst {dimension_numbers = #tpu.dot_dimension_numbers<[1], [0], [0], [1], [0, 0, 1, 1], [], []>} : vector<16x128xbf16>, vector<128x128xbf16>, vector<16x128xf32> -> vector<16x128xf32>
    %9 = arith.truncf %8 : vector<16x128xf32> to vector<16x128xbf16>
    %c0_3 = arith.constant 0 : index
    %c0_4 = arith.constant 0 : index
    %10 = vector.load %arg3[%c0_3, %c0_4] : memref<128x128xbf16, #tpu.memory_space<vmem>>, vector<128x128xbf16>
    %cst_5 = arith.constant dense<0.000000e+00> : vector<16x128xf32>
    %11 = tpu.matmul %9, %10, %cst_5 {dimension_numbers = #tpu.dot_dimension_numbers<[1], [0], [0], [1], [0, 0, 1, 1], [], []>} : vector<16x128xbf16>, vector<128x128xbf16>, vector<16x128xf32> -> vector<16x128xf32>
    %c0_6 = arith.constant 0 : index
    %c0_7 = arith.constant 0 : index
    %12 = vector.load %arg4[%c0_6, %c0_7] : memref<1x128xf32, #tpu.memory_space<vmem>>, vector<1x128xf32>
    %13 = vector.broadcast %12 : vector<1x128xf32> to vector<16x128xf32>
    %14 = arith.addf %11, %13 : vector<16x128xf32>
    %cst_8 = arith.constant 5.000000e-01 : f32
    %15 = vector.broadcast %cst_8 : f32 to vector<16x128xf32>
    %16 = arith.mulf %15, %14 : vector<16x128xf32>
    %17 = arith.mulf %14, %14 : vector<16x128xf32>
    %18 = arith.mulf %17, %14 : vector<16x128xf32>
    %cst_9 = arith.constant 4.471500e-02 : f32
    %19 = vector.broadcast %cst_9 : f32 to vector<16x128xf32>
    %20 = arith.mulf %19, %18 : vector<16x128xf32>
    %21 = arith.addf %14, %20 : vector<16x128xf32>
    %cst_10 = arith.constant 0.797884583 : f32
    %22 = vector.broadcast %cst_10 : f32 to vector<16x128xf32>
    %23 = arith.mulf %22, %21 : vector<16x128xf32>
    %24 = math.tanh %23 : vector<16x128xf32>
    %cst_11 = arith.constant 1.000000e+00 : f32
    %25 = vector.broadcast %cst_11 : f32 to vector<16x128xf32>
    %26 = arith.addf %25, %24 : vector<16x128xf32>
    %27 = arith.mulf %16, %26 : vector<16x128xf32>
    %c0_12 = arith.constant 0 : index
    %c0_13 = arith.constant 0 : index
    %28 = vector.load %arg5[%c0_12, %c0_13] : memref<16x128xf32, #tpu.memory_space<vmem>>, vector<16x128xf32>
    tpu.vector_store %arg5[%c0_12, %c0_13], %27 {strides = array<i32>} : memref<16x128xf32, #tpu.memory_space<vmem>>, vector<16x128xf32>,
    return
  }
  func.func @transform_0(%arg0: i32) -> (i32, i32) {
    %c0_i32 = arith.constant 0 : i32
    %c0_i32_0 = arith.constant 0 : i32
    return %arg0, %c0_i32 : i32, i32
  }
  func.func @transform_1(%arg0: i32) -> (i32, i32) {
    %c0_i32 = arith.constant 0 : i32
    %c0_i32_0 = arith.constant 0 : i32
    %c0_i32_1 = arith.constant 0 : i32
    return %c0_i32, %c0_i32_0 : i32, i32
  }
  func.func @transform_2(%arg0: i32) -> (i32, i32) {
    %c0_i32 = arith.constant 0 : i32
    %c0_i32_0 = arith.constant 0 : i32
    %c0_i32_1 = arith.constant 0 : i32
    return %c0_i32, %c0_i32_0 : i32, i32
  }
  func.func @transform_3(%arg0: i32) -> (i32, i32) {
    %c0_i32 = arith.constant 0 : i32
    %c0_i32_0 = arith.constant 0 : i32
    %c0_i32_1 = arith.constant 0 : i32
    return %c0_i32, %c0_i32_0 : i32, i32
  }
  func.func @transform_4(%arg0: i32) -> (i32, i32) {
    %c0_i32 = arith.constant 0 : i32
    %c0_i32_0 = arith.constant 0 : i32
    return %arg0, %c0_i32 : i32, i32
  }
}

</mosaic_0001>

<llo_original>
// kernel: tpu_custom_call.1
$region0: #{tpu_custom_call.1}
  #allocation0 [shape = 'u32[]', space=smem, size = 0x4, offset = 0x4, fixed_abs, tag = 'smem constant byte address 0x4 - core index']
  #allocation1 [shape = 'u32[72,128]{1,0:T(1,128)}', space=vmem, size = 0x9000, scoped, tag = 'internal scratch']
  %s0 = inlined_call_operand.vmem [shape: s32[16,1], index: 0, kind: input, shape index: {}]
  %s1 = inlined_call_operand.hbm [shape: bf16[128,128], index: 1, kind: input, shape index: {}]
  %s2 = inlined_call_operand.hbm [shape: bf16[128,128], index: 2, kind: input, shape index: {}]
  %s3 = inlined_call_operand.vmem [shape: f32[1,128], index: 3, kind: input, shape index: {}]
  %s4 = inlined_call_operand.hbm [shape: f32[16,128], index: 4, kind: output, shape index: {}]
  %s5 = sld [smem:[#allocation0]]
  $region34: #{tpu_custom_call.1} parent=0
    _
  %s7 = ssub.s32 1, %s5
  %s8 = scalar_select 0, %s7, %s5
  $region1: #{tpu_custom_call.1} parent=0
    #allocation2 [shape = 'u8[32768]{0}', space=vmem, size = 0x8000, scoped, tag = 'input window, operand 1, single buffered']
    #allocation3 [shape = 's32[1]{0}', space=sflag, size = 0x4, scoped, tag = 'scoped memory for tpu_custom_call.1']
    #allocation4 [shape = 's32[1]{0}', space=sflag, size = 0x4, scoped, tag = 'scoped memory for tpu_custom_call.1']
    #allocation5 [shape = 'u8[32768]{0}', space=vmem, size = 0x8000, scoped, tag = 'input window, operand 2, single buffered']
    #allocation6 [shape = 's32[1]{0}', space=sflag, size = 0x4, scoped, tag = 'scoped memory for tpu_custom_call.1']
    #allocation7 [shape = 'u8[8192]{0}', space=vmem, size = 0x2000, scoped, tag = 'output window, operand 0, single buffered']
    %9 = vsyncpa [#allocation3], 0
    %10 = vsyncpa [#allocation6], 0
    %11 = vsyncpa [#allocation4], 0
    // Predicated region
    $region2: #{tpu_custom_call.1} parent=1 // pred_check
      _
    $region3: #{tpu_custom_call.1} parent=1 // pred_check_branch
      %13 = sbr.rel (0) target = $region5
    $region4: #{tpu_custom_call.1} parent=1 // pred_region
      _
    $region5: #{tpu_custom_call.1} parent=1 // pred_fallthru
      _
    // Predicated region
    $region6: #{tpu_custom_call.1} parent=1 // pred_check
      _
    $region7: #{tpu_custom_call.1} parent=1 // pred_check_branch
      %15 = sbr.rel (0) target = $region9
    $region8: #{tpu_custom_call.1} parent=1 // pred_region
      %17 = vsyncadd [#allocation3], 0
      %s18 = sshll.u32 %s1, 4
      %s19 = int_to_ptr.hbm [resolvable:$true] %s18
      %s20 = sshll.u32 [#allocation2], 4
      %s21 = int_to_ptr.vmem [resolvable:$true] %s20
      %26 = dma.hbm_to_vmem [thread:$0]  %s19, 1024, %s21, [#allocation3], 64, 64, 4
    $region9: #{tpu_custom_call.1} parent=1 // pred_fallthru
      _
    // Predicated region
    $region10: #{tpu_custom_call.1} parent=1 // pred_check
      _
    $region11: #{tpu_custom_call.1} parent=1 // pred_check_branch
      %28 = sbr.rel (0) target = $region13
    $region12: #{tpu_custom_call.1} parent=1 // pred_region
      %30 = vsyncadd [#allocation6], 0
      %s31 = sshll.u32 %s2, 4
      %s32 = int_to_ptr.hbm [resolvable:$true] %s31
      %s33 = sshll.u32 [#allocation5], 4
      %s34 = int_to_ptr.vmem [resolvable:$true] %s33
      %39 = dma.hbm_to_vmem [thread:$0]  %s32, 1024, %s34, [#allocation6], 64, 64, 4
    $region13: #{tpu_custom_call.1} parent=1 // pred_fallthru
      _
    // Predicated region
    $region14: #{tpu_custom_call.1} parent=1 // pred_check
      _
    $region15: #{tpu_custom_call.1} parent=1 // pred_check_branch
      %41 = sbr.rel (0) target = $region17
    $region16: #{tpu_custom_call.1} parent=1 // pred_region
      _
    $region17: #{tpu_custom_call.1} parent=1 // pred_fallthru
      _
    // Predicated region
    $region18: #{tpu_custom_call.1} parent=1 // pred_check
      _
    $region19: #{tpu_custom_call.1} parent=1 // pred_check_branch
      %43 = sbr.rel (0) target = $region21
    $region20: #{tpu_custom_call.1} parent=1 // pred_region
      %45 = dma.done [#allocation3], 1024
    $region21: #{tpu_custom_call.1} parent=1 // pred_fallthru
      _
    // Predicated region
    $region22: #{tpu_custom_call.1} parent=1 // pred_check
      _
    $region23: #{tpu_custom_call.1} parent=1 // pred_check_branch
      %47 = sbr.rel (0) target = $region25
    $region24: #{tpu_custom_call.1} parent=1 // pred_region
      %49 = dma.done [#allocation6], 1024
    $region25: #{tpu_custom_call.1} parent=1 // pred_fallthru
      _
    %v50 = vld [vmem:[%s0] sm:$0xff]
    %v51 = vld [vmem:[%s0 + $0x8] sm:$0xff]
    %v52 = vlaneseq
    %v53 = vand.u32 %v52, 127
    %54 = vset.pattern.permute.xlu0 0
    %55 = vperm.xlu0 %54, %v50
    %v56 = vpop.permute.xlu0 %55
    %57 = vset.pattern.permute.xlu0 0
    %58 = vperm.xlu0 %57, %v51
    %v59 = vpop.permute.xlu0 %58
    %vm60 = vcmp.eq.s32.totalorder %v56, %v53
    %vm61 = vcmp.eq.s32.totalorder %v59, %v53
    %v62 = vsel %vm60, 1, 0
    %v63 = vsel %vm61, 1, 0
    %v64 = vcvt.s32.f32 %v62
    %v65 = vcvt.s32.f32 %v63
    %v66 = vpack.c.bf16 %v65, %v64
    %v67 = vld [vmem:[#allocation2] sm:$0xf]
    %v68 = vld [vmem:[#allocation2 + $0x4] sm:$0xf]
    %v69 = vld [vmem:[#allocation2 + $0x8] sm:$0xf]
    %v70 = vld [vmem:[#allocation2 + $0xc] sm:$0xf]
    %v71 = vld [vmem:[#allocation2 + $0x10] sm:$0xf]
    %v72 = vld [vmem:[#allocation2 + $0x14] sm:$0xf]
    %v73 = vld [vmem:[#allocation2 + $0x18] sm:$0xf]
    %v74 = vld [vmem:[#allocation2 + $0x1c] sm:$0xf]
    %v75 = vld [vmem:[#allocation2 + $0x20] sm:$0xf]
    %v76 = vld [vmem:[#allocation2 + $0x24] sm:$0xf]
    %v77 = vld [vmem:[#allocation2 + $0x28] sm:$0xf]
    %v78 = vld [vmem:[#allocation2 + $0x2c] sm:$0xf]
    %v79 = vld [vmem:[#allocation2 + $0x30] sm:$0xf]
    %v80 = vld [vmem:[#allocation2 + $0x34] sm:$0xf]
    %v81 = vld [vmem:[#allocation2 + $0x38] sm:$0xf]
    %v82 = vld [vmem:[#allocation2 + $0x3c] sm:$0xf]
    %v99 = vunpack.c.l.b16 %v67
    %v100 = vunpack.c.l.b16 %v68
    %v101 = vunpack.c.l.b16 %v69
    %v102 = vunpack.c.l.b16 %v70
    %v103 = vunpack.c.l.b16 %v71
    %v104 = vunpack.c.l.b16 %v72
    %v105 = vunpack.c.l.b16 %v73
    %v106 = vunpack.c.l.b16 %v74
    %v107 = vunpack.c.l.b16 %v75
    %v108 = vunpack.c.l.b16 %v76
    %v109 = vunpack.c.l.b16 %v77
    %v110 = vunpack.c.l.b16 %v78
    %v111 = vunpack.c.l.b16 %v79
    %v112 = vunpack.c.l.b16 %v80
    %v113 = vunpack.c.l.b16 %v81
    %v114 = vunpack.c.l.b16 %v82
    %v115 = vpack.c.b16 %v100, %v99
    %v116 = vpack.c.b16 %v102, %v101
    %v117 = vpack.c.b16 %v104, %v103
    %v118 = vpack.c.b16 %v106, %v105
    %v119 = vpack.c.b16 %v108, %v107
    %v120 = vpack.c.b16 %v110, %v109
    %v121 = vpack.c.b16 %v112, %v111
    %v122 = vpack.c.b16 %v114, %v113
    %131 = vmatpush.bf16.msra.mxu0 %v122
    %132 = vmatpush.bf16.msra.mxu0 %v121
    %133 = vmatpush.bf16.msra.mxu0 %v120
    %134 = vmatpush.bf16.msra.mxu0 %v119
    %135 = vmatpush.bf16.msra.mxu0 %v118
    %136 = vmatpush.bf16.msra.mxu0 %v117
    %137 = vmatpush.bf16.msra.mxu0 %v116
    %138 = vmatpush.bf16.msra.mxu0 %v115
    %139 = vmatmul.bf16.gmra.mxu0 %v66
    %v140 = vpop.f32.mrf.mxu0
    %v141 = vadd.f32 0.0, %v140
    %v142 = vpop.f32.mrf.mxu0
    %v143 = vadd.f32 0.0, %v142
    %144 = vdwg.mxu0
    %v145 = vpack.c.bf16 %v143, %v141
    %v146 = vld [vmem:[#allocation5] sm:$0xf]
    %v147 = vld [vmem:[#allocation5 + $0x4] sm:$0xf]
    %v148 = vld [vmem:[#allocation5 + $0x8] sm:$0xf]
    %v149 = vld [vmem:[#allocation5 + $0xc] sm:$0xf]
    %v150 = vld [vmem:[#allocation5 + $0x10] sm:$0xf]
    %v151 = vld [vmem:[#allocation5 + $0x14] sm:$0xf]
    %v152 = vld [vmem:[#allocation5 + $0x18] sm:$0xf]
    %v153 = vld [vmem:[#allocation5 + $0x1c] sm:$0xf]
    %v154 = vld [vmem:[#allocation5 + $0x20] sm:$0xf]
    %v155 = vld [vmem:[#allocation5 + $0x24] sm:$0xf]
    %v156 = vld [vmem:[#allocation5 + $0x28] sm:$0xf]
    %v157 = vld [vmem:[#allocation5 + $0x2c] sm:$0xf]
    %v158 = vld [vmem:[#allocation5 + $0x30] sm:$0xf]
    %v159 = vld [vmem:[#allocation5 + $0x34] sm:$0xf]
    %v160 = vld [vmem:[#allocation5 + $0x38] sm:$0xf]
    %v161 = vld [vmem:[#allocation5 + $0x3c] sm:$0xf]
    %v162 = vld [vmem:[%s3] sm:$0x1]
    %v164 = vperm.slane %v162, 0
    %v182 = vunpack.c.l.b16 %v146
    %v183 = vunpack.c.l.b16 %v147
    %v184 = vunpack.c.l.b16 %v148
    %v185 = vunpack.c.l.b16 %v149
    %v186 = vunpack.c.l.b16 %v150
    %v187 = vunpack.c.l.b16 %v151
    %v188 = vunpack.c.l.b16 %v152
    %v189 = vunpack.c.l.b16 %v153
    %v190 = vunpack.c.l.b16 %v154
    %v191 = vunpack.c.l.b16 %v155
    %v192 = vunpack.c.l.b16 %v156
    %v193 = vunpack.c.l.b16 %v157
    %v194 = vunpack.c.l.b16 %v158
    %v195 = vunpack.c.l.b16 %v159
    %v196 = vunpack.c.l.b16 %v160
    %v197 = vunpack.c.l.b16 %v161
    %v198 = vpack.c.b16 %v183, %v182
    %v199 = vpack.c.b16 %v185, %v184
    %v200 = vpack.c.b16 %v187, %v186
    %v201 = vpack.c.b16 %v189, %v188
    %v202 = vpack.c.b16 %v191, %v190
    %v203 = vpack.c.b16 %v193, %v192
    %v204 = vpack.c.b16 %v195, %v194
    %v205 = vpack.c.b16 %v197, %v196
    %214 = vmatpush.bf16.msra.mxu0 %v205
    %215 = vmatpush.bf16.msra.mxu0 %v204
    %216 = vmatpush.bf16.msra.mxu0 %v203
    %217 = vmatpush.bf16.msra.mxu0 %v202
    %218 = vmatpush.bf16.msra.mxu0 %v201
    %219 = vmatpush.bf16.msra.mxu0 %v200
    %220 = vmatpush.bf16.msra.mxu0 %v199
    %221 = vmatpush.bf16.msra.mxu0 %v198
    %222 = vmatmul.bf16.gmra.mxu0 %v145
    %v223 = vpop.f32.mrf.mxu0
    %v224 = vadd.f32 %v164, %v223
    %v225 = vpop.f32.mrf.mxu0
    %v226 = vadd.f32 %v164, %v225
    %227 = vdwg.mxu0
    %v228 = vmul.f32 %v224, 0.5
    %v229 = vmul.f32 %v226, 0.5
    %v230 = vmul.f32 %v224, %v224
    %v231 = vmul.f32 %v226, %v226
    %v232 = vmul.f32 %v230, %v224
    %v233 = vmul.f32 %v231, %v226
    %v234 = vmul.f32 %v232, 0.044715
    %v235 = vmul.f32 %v233, 0.044715
    %v236 = vadd.f32 %v224, %v234
    %v237 = vadd.f32 %v226, %v235
    %v238 = vmul.f32 %v236, 0.7978846
    %v239 = vmul.f32 %v237, 0.7978846
    %v240 = vtanh.pop %v238
    %v241 = vtanh.pop %v239
    %v242 = vadd.f32 %v240, 1.0
    %v243 = vadd.f32 %v241, 1.0
    %v244 = vmul.f32 %v228, %v242
    %v245 = vmul.f32 %v229, %v243
    %246 = vst [vmem:[#allocation7] sm:$0xff] %v244
    %247 = vst [vmem:[#allocation7 + $0x8] sm:$0xff] %v245
    // Predicated region
    $region26: #{tpu_custom_call.1} parent=1 // pred_check
      _
    $region27: #{tpu_custom_call.1} parent=1 // pred_check_branch
      %249 = sbr.rel (0) target = $region29
    $region28: #{tpu_custom_call.1} parent=1 // pred_region
      %251 = vsyncadd [#allocation4], 0
      %s252 = sshll.u32 [#allocation7], 4
      %s253 = int_to_ptr.vmem [resolvable:$true] %s252
      %s254 = sshll.u32 %s4, 4
      %s255 = int_to_ptr.hbm [resolvable:$true] %s254
      %260 = dma.vmem_to_hbm [thread:$0]  %s253, 256, %s255, [#allocation4], 128, 128, 8
    $region29: #{tpu_custom_call.1} parent=1 // pred_fallthru
      _
    // Predicated region
    $region30: #{tpu_custom_call.1} parent=1 // pred_check
      _
    $region31: #{tpu_custom_call.1} parent=1 // pred_check_branch
      %262 = sbr.rel (0) target = $region33
    $region32: #{tpu_custom_call.1} parent=1 // pred_region
      %264 = dma.done [#allocation4], 256
    $region33: #{tpu_custom_call.1} parent=1 // pred_fallthru
      _
    %265 = vsyncpa [#allocation3], 1
    %266 = vsyncpa [#allocation6], 1
    %267 = vsyncpa [#allocation4], 1

</llo_original>
